<compile_context>
chip_gen: v5e
topology: v5e:2x2
jax: 0.10.0
libtpu: 0.0.40
codegen_flags: <defaults>
</compile_context>

<pallas_src>
import functools

import numpy as np
import jax
import jax.numpy as jnp
from jax import lax
from jax.experimental import pallas as pl
from jax.experimental.pallas import tpu as pltpu


def _dsconv_kernel(xt_ref, w1_ref, wdc_ref, mask_ref, o_ref, h_ref, *,
                   K, S, LT2, Ltile):
    # xt_ref  : (1, 1, C_in, Wt)  one batch elem, one L-tile; Wt = S*LT2.
    #                             column r*LT2 + i <-> padded pos (lt*Ltile+i)*S + r
    # w1_ref  : (TC, C_in)        BN1-scaled pointwise weight (compute dtype)
    # wdc_ref : (TC, K + 2)       [BN2-scaled depthwise taps | c1 shift | c2 shift]
    # mask_ref: (1, 1, Wt)        1.0 on valid padded positions, 0.0 elsewhere
    # o_ref   : (1, TC, Ltile)    strided depthwise output tile (lane-dense)
    # h_ref   : (TC, Wt)          VMEM scratch for post-ReLU pointwise activations
    x = xt_ref[0, 0]                                          # (C_in, Wt)

    # Pointwise conv (kernel_size=1) == channel matmul -> MXU, f32 accumulate.
    h = jnp.dot(w1_ref[...], x, preferred_element_type=jnp.float32)   # (TC, Wt)

    wdc = wdc_ref[...]                                        # one load, hoisted
    c1 = wdc[:, K:K + 1]                                      # (TC, 1)
    c2 = wdc[:, K + 1:K + 2]                                  # (TC, 1)

    # (conv bias + BN1) shift, ReLU, then zero padding/halo-pad columns
    # (they must be exactly 0, not ReLU(c1)).
    h = jnp.maximum(h + c1, 0.0) * mask_ref[0]
    h_ref[...] = h.astype(h_ref.dtype)

    # Depthwise conv with stride: in the phase layout tap k reads the
    # unit-stride window starting at the (lane-aligned + k//S) column
    # (k % S) * LT2 + (k // S).
    tc = o_ref.shape[1]
    acc = jnp.zeros((tc, Ltile), jnp.float32)
    for k in range(K):                                        # static, unrolled
        a = (k % S) * LT2 + (k // S)
        acc = acc + wdc[:, k:k + 1] * h_ref[:, a:a + Ltile]

    # (conv bias + BN2) shift + ReLU, lane-dense store.
    o_ref[0] = jnp.maximum(acc + c2, 0.0).astype(o_ref.dtype)


def _round_up(x, m):
    return ((x + m - 1) // m) * m


def _pick_cout_tile(c_out):
    # Cap at 256: bounds the (TC, Ltile) f32 accumulator / spill pressure
    # (matters most on v5e's single vector-store slot).
    if c_out <= 256:
        return c_out
    for t in (256, 128, 64, 32, 16, 8):
        if c_out % t == 0:
            return t
    return c_out


def _vmem_capacity_bytes():
    try:
        return int(pltpu.get_tpu_info().vmem_capacity_bytes)
    except Exception:
        return 64 * 1024 * 1024          # conservative (v7x per-TC physical)


def _vmem_usage_bytes(C_in, TC, K, S, Ltile, Hpad, x_isz, h_isz, o_isz):
    LT2 = Ltile + Hpad
    Wt = S * LT2
    x_blk = C_in * Wt * x_isz
    w_blk = TC * C_in * x_isz + TC * (K + 2) * 4
    m_blk = Wt * 4
    o_blk = TC * Ltile * o_isz
    h_scr = TC * Wt * h_isz
    # double-buffered inputs/outputs + single scratch
    return 2 * (x_blk + w_blk + m_blk + o_blk) + h_scr


def _pick_ltile(L_out, C_in, TC, K, S, Hpad, x_isz, h_isz, o_isz, budget):
    lt = min(_round_up(L_out, 128), 8192)
    while lt > 128 and _vmem_usage_bytes(C_in, TC, K, S, lt, Hpad,
                                         x_isz, h_isz, o_isz) > budget:
        lt = _round_up(max(lt // 2, 128), 128)
    return lt


def depthwise_separable_conv1d(x, params, *, kernel_size, stride,
                               compute_dtype=jnp.bfloat16, scratch_dtype=None,
                               ltile=None):
    """x: (N, C_in, L) float32 -> (N, C_out, L_out) (PyTorch eval semantics)."""
    N, C_in, L = x.shape
    K, S = kernel_size, stride
    assert K >= 1 and S >= 1
    pad = K // 2
    L_out = (L + 2 * pad - K) // S + 1
    assert L_out >= 1
    eps = 1e-5
    if scratch_dtype is None:
        scratch_dtype = compute_dtype     # use f32 here on v5e (no bf16 VPU)

    w1 = params["w1"].reshape(-1, C_in)                       # (C_out, C_in)
    C_out = w1.shape[0]
    wd = params["wd"].reshape(C_out, K)                       # (C_out, K)

    # Fold conv bias + BatchNorm1d (inference) into weights + per-channel shifts.
    s1 = params["gamma1"] / jnp.sqrt(params["var1"] + eps)
    w1s = (w1 * s1[:, None]).astype(compute_dtype)
    c1 = (params["b1"] - params["mean1"]) * s1 + params["beta1"]
    s2 = params["gamma2"] / jnp.sqrt(params["var2"] + eps)
    wds = wd * s2[:, None]
    c2 = (params["bd"] - params["mean2"]) * s2 + params["beta2"]
    wdc = jnp.concatenate([wds, c1[:, None], c2[:, None]],
                          axis=1).astype(jnp.float32)         # (C_out, K+2)

    TC = _pick_cout_tile(C_out)
    H = (K - 1) // S                                          # per-phase halo rows
    Hpad = 0 if H == 0 else _round_up(H, 128)

    x_isz = jnp.dtype(compute_dtype).itemsize
    h_isz = jnp.dtype(scratch_dtype).itemsize
    o_isz = jnp.dtype(x.dtype).itemsize

    cap = _vmem_capacity_bytes()
    budget = int(cap * 0.7)
    if ltile is None:
        Ltile = _pick_ltile(L_out, C_in, TC, K, S, Hpad,
                            x_isz, h_isz, o_isz, budget)
    else:
        Ltile = _round_up(max(int(ltile), 128), 128)
    n_lt = -(-L_out // Ltile)
    Lo_pad = n_lt * Ltile                                     # lane-dense output len
    LT2 = Ltile + Hpad                                        # per-phase tile + halo
    Wt = S * LT2                                              # kernel tile width

    usage = _vmem_usage_bytes(C_in, TC, K, S, Ltile, Hpad, x_isz, h_isz, o_isz)
    vmem_limit = int(min(max(cap - (8 << 20), 32 << 20),
                         max(usage + (16 << 20), 32 << 20)))

    # Zero-pad, de-interleave the length axis into `stride` phases, then gather
    # overlapping per-L-tile slabs (halo materialized once in HBM).
    R = max(-(-(L + 2 * pad) // S), Lo_pad + Hpad)            # per-phase rows
    total = S * R
    xp = jnp.pad(x.astype(compute_dtype), ((0, 0), (0, 0), (pad, total - pad - L)))
    xph = xp.reshape(N, C_in, R, S).transpose(0, 1, 3, 2)     # (N, C_in, S, R)
    row_idx = (np.arange(n_lt)[:, None] * Ltile
               + np.arange(LT2)[None, :]).reshape(-1).astype(np.int32)
    xt = jnp.take(xph, jnp.asarray(row_idx), axis=3)          # (N, C_in, S, n_lt*LT2)
    xt = (xt.reshape(N, C_in, S, n_lt, LT2)
            .transpose(0, 3, 1, 2, 4)
            .reshape(N, n_lt, C_in, Wt))                      # (N, n_lt, C_in, Wt)

    # Column-validity mask of the phase layout, per L-tile (trace-time numpy).
    cols = np.arange(Wt)
    r_np = cols // LT2
    i_np = cols % LT2
    pos = (np.arange(n_lt)[:, None] * Ltile + i_np[None, :]) * S + r_np[None, :]
    mask = jnp.asarray(((pos >= pad) & (pos < pad + L))
                       .astype(np.float32)[:, None, :])       # (n_lt, 1, Wt)

    kernel = functools.partial(_dsconv_kernel, K=K, S=S, LT2=LT2, Ltile=Ltile)

    Ct = C_out // TC
    x_blk_bytes = C_in * Wt * x_isz
    w_blk_bytes = TC * C_in * x_isz + TC * (K + 2) * 4
    weight_heavy = w_blk_bytes > x_blk_bytes

    if weight_heavy:
        # Weights fetched once per channel tile; x block re-fetched per step.
        grid = (Ct, N, n_lt)
        xt_map = lambda c, n, lt: (n, lt, 0, 0)
        w_map = lambda c, n, lt: (c, 0)
        m_map = lambda c, n, lt: (lt, 0, 0)
        o_map = lambda c, n, lt: (n, c, lt)
    else:
        # x block fetched once per (n, l-tile); weights re-fetched per step.
        grid = (N, n_lt, Ct)
        xt_map = lambda n, lt, c: (n, lt, 0, 0)
        w_map = lambda n, lt, c: (c, 0)
        m_map = lambda n, lt, c: (lt, 0, 0)
        o_map = lambda n, lt, c: (n, c, lt)

    out_full = pl.pallas_call(
        kernel,
        out_shape=jax.ShapeDtypeStruct((N, C_out, Lo_pad), x.dtype),
        grid_spec=pltpu.PrefetchScalarGridSpec(
            num_scalar_prefetch=0,
            grid=grid,
            in_specs=[
                pl.BlockSpec((1, 1, C_in, Wt), xt_map),
                pl.BlockSpec((TC, C_in), w_map),
                pl.BlockSpec((TC, K + 2), w_map),
                pl.BlockSpec((1, 1, Wt), m_map),
            ],
            out_specs=pl.BlockSpec((1, TC, Ltile), o_map),
            scratch_shapes=[pltpu.VMEM((TC, Wt), scratch_dtype)],
        ),
        compiler_params=pltpu.CompilerParams(
            dimension_semantics=("parallel", "parallel", "parallel"),
            vmem_limit_bytes=vmem_limit),
    )(xt, w1s, wdc, mask)

    if Lo_pad == L_out:
        return out_full
    return out_full[:, :, :L_out]


def _reference(x, params, *, kernel_size, stride):
    """Pure-JAX f32 mirror of the PyTorch module in eval() mode."""
    eps = 1e-5
    K, S = kernel_size, stride
    pad = K // 2
    w1 = params["w1"][:, :, 0]
    h = jnp.einsum("oc,ncl->nol", w1, x, precision=lax.Precision.HIGHEST)
    h = h + params["b1"][None, :, None]
    h = (h - params["mean1"][None, :, None]) * (
        params["gamma1"] / jnp.sqrt(params["var1"] + eps))[None, :, None]
    h = jnp.maximum(h + params["beta1"][None, :, None], 0.0)
    hp = jnp.pad(h, ((0, 0), (0, 0), (pad, pad)))
    N, C_out, _ = h.shape
    L = x.shape[-1]
    L_out = (L + 2 * pad - K) // S + 1
    wd = params["wd"][:, 0, :]
    d = jnp.zeros((N, C_out, L_out), jnp.float32)
    for k in range(K):
        win = hp[:, :, k: k + (L_out - 1) * S + 1: S]
        d = d + wd[None, :, k:k + 1] * win
    d = d + params["bd"][None, :, None]
    d = (d - params["mean2"][None, :, None]) * (
        params["gamma2"] / jnp.sqrt(params["var2"] + eps))[None, :, None]
    return jnp.maximum(d + params["beta2"][None, :, None], 0.0)


def init_params(key, in_channels, out_channels, kernel_size):
    ks = jax.random.split(key, 10)
    f32 = jnp.float32
    return {
        # pointwise Conv1d(in, out, 1): weight (out, in, 1), bias (out,)
        "w1": jax.random.normal(ks[0], (out_channels, in_channels, 1), f32) * 0.3,
        "b1": jax.random.normal(ks[1], (out_channels,), f32) * 0.1,
        # BatchNorm1d #1 (inference-mode running stats)
        "gamma1": 1.0 + 0.1 * jax.random.normal(ks[2], (out_channels,), f32),
        "beta1": 0.1 * jax.random.normal(ks[3], (out_channels,), f32),
        "mean1": 0.1 * jax.random.normal(ks[4], (out_channels,), f32),
        "var1": jax.random.uniform(ks[5], (out_channels,), f32, 0.5, 1.5),
        # depthwise Conv1d(out, out, K, stride, pad=K//2, groups=out):
        #   weight (out, 1, K), bias (out,)
        "wd": jax.random.normal(ks[6], (out_channels, 1, kernel_size), f32) * 0.3,
        "bd": jax.random.normal(ks[7], (out_channels,), f32) * 0.1,
        # BatchNorm1d #2
        "gamma2": 1.0 + 0.1 * jax.random.normal(ks[8], (out_channels,), f32),
        "beta2": 0.1 * jax.random.normal(ks[9], (out_channels,), f32),
        "mean2": jnp.zeros((out_channels,), f32),
        "var2": jnp.ones((out_channels,), f32),
    }


if __name__ == "__main__":
    key = jax.random.PRNGKey(0)
    k1, k2, k3, k4 = jax.random.split(key, 4)

    # Config 1: small shapes implied by the module's forward (x is (N, C_in, L)).
    N, C_in, C_out, L = 2, 4, 8, 16
    K, S = 3, 2
    x = jax.random.normal(k1, (N, C_in, L), jnp.float32)
    params = init_params(k2, C_in, C_out, K)
    ref = _reference(x, params, kernel_size=K, stride=S)
    L_out = (L + 2 * (K // 2) - K) // S + 1

    # f32 datapath: tight check against the PyTorch-eval reference.
    out = depthwise_separable_conv1d(x, params, kernel_size=K, stride=S,
                                     compute_dtype=jnp.float32)
    out = jax.block_until_ready(out)
    assert out.shape == (N, C_out, L_out), out.shape
    assert bool(jnp.all(out >= 0.0))
    err = float(jnp.max(jnp.abs(out - ref)))
    assert jnp.allclose(out, ref, atol=1e-3, rtol=1e-3), err

    # bf16 MXU datapath (default / perf config): loose check.
    out_bf = depthwise_separable_conv1d(x, params, kernel_size=K, stride=S)
    out_bf = jax.block_until_ready(out_bf)
    err_bf = float(jnp.max(jnp.abs(out_bf - ref)))
    assert jnp.allclose(out_bf, ref, atol=5e-2, rtol=5e-2), err_bf

    # Config 2: longer sequence with a forced small L-tile to exercise the
    # L-tiling + halo path (multiple length tiles, K=5, stride=2).
    N2, C_in2, C_out2, L2 = 2, 8, 32, 600
    K2, S2 = 5, 2
    x2 = jax.random.normal(k3, (N2, C_in2, L2), jnp.float32)
    params2 = init_params(k4, C_in2, C_out2, K2)
    out2 = depthwise_separable_conv1d(x2, params2, kernel_size=K2, stride=S2,
                                      compute_dtype=jnp.float32, ltile=128)
    out2 = jax.block_until_ready(out2)
    ref2 = _reference(x2, params2, kernel_size=K2, stride=S2)
    assert out2.shape == ref2.shape, (out2.shape, ref2.shape)
    err2 = float(jnp.max(jnp.abs(out2 - ref2)))
    assert jnp.allclose(out2, ref2, atol=1e-3, rtol=1e-3), err2

    print("KERNEL_OK")
</pallas_src>

<mosaic_0001>
module attributes {stable_mosaic.version = 11 : i64} {
  func.func @_dsconv_kernel(%arg0: i32, %arg1: i32, %arg2: i32, %arg3: memref<1x1x4x512xf32, #tpu.memory_space<vmem>>, %arg4: memref<8x4xf32, #tpu.memory_space<vmem>>, %arg5: memref<8x5xf32, #tpu.memory_space<vmem>>, %arg6: memref<1x1x512xf32, #tpu.memory_space<vmem>>, %arg7: memref<1x8x128xf32, #tpu.memory_space<vmem>>, %arg8: memref<8x512xf32, #tpu.memory_space<vmem>>) attributes {dimension_semantics = [#tpu.dimension_semantics<parallel>, #tpu.dimension_semantics<parallel>, #tpu.dimension_semantics<parallel>], iteration_bounds = array<i64: 2, 1, 1>, scalar_prefetch = 0 : i64, scratch_operands = 1 : i64, tpu.core_type = #tpu.core_type<tc>, window_params = [{transform_indices = @transform_0, window_bounds = array<i64: 1, 1, 4, 512>}, {transform_indices = @transform_1, window_bounds = array<i64: 8, 4>}, {transform_indices = @transform_2, window_bounds = array<i64: 8, 5>}, {transform_indices = @transform_3, window_bounds = array<i64: 1, 1, 512>}, {transform_indices = @transform_4, window_bounds = array<i64: 1, 8, 128>}]} {
    %c0 = arith.constant 0 : index
    %c0_0 = arith.constant 0 : index
    %c0_1 = arith.constant 0 : index
    %c0_2 = arith.constant 0 : index
    %0 = vector.load %arg3[%c0, %c0_0, %c0_1, %c0_2] : memref<1x1x4x512xf32, #tpu.memory_space<vmem>>, vector<1x1x4x512xf32>
    %1 = vector.shape_cast %0 : vector<1x1x4x512xf32> to vector<4x512xf32>
    %c0_3 = arith.constant 0 : index
    %c0_4 = arith.constant 0 : index
    %2 = vector.load %arg4[%c0_3, %c0_4] : memref<8x4xf32, #tpu.memory_space<vmem>>, vector<8x4xf32>
    %cst = arith.constant dense<0.000000e+00> : vector<8x512xf32>
    %3 = tpu.matmul %2, %1, %cst {dimension_numbers = #tpu.dot_dimension_numbers<[1], [0], [0], [1], [0, 0, 1, 1], [], []>} : vector<8x4xf32>, vector<4x512xf32>, vector<8x512xf32> -> vector<8x512xf32>
    %c0_5 = arith.constant 0 : index
    %c0_6 = arith.constant 0 : index
    %4 = vector.load %arg5[%c0_5, %c0_6] : memref<8x5xf32, #tpu.memory_space<vmem>>, vector<8x5xf32>
    %5 = vector.extract_strided_slice %4 {offsets = [0, 3], sizes = [8, 1], strides = [1, 1]} : vector<8x5xf32> to vector<8x1xf32>
    %6 = vector.extract_strided_slice %4 {offsets = [0, 4], sizes = [8, 1], strides = [1, 1]} : vector<8x5xf32> to vector<8x1xf32>
    %7 = vector.broadcast %5 : vector<8x1xf32> to vector<8x512xf32>
    %8 = arith.addf %3, %7 : vector<8x512xf32>
    %cst_7 = arith.constant 0.000000e+00 : f32
    %9 = vector.broadcast %cst_7 : f32 to vector<8x512xf32>
    %10 = arith.maximumf %8, %9 : vector<8x512xf32>
    %c0_8 = arith.constant 0 : index
    %c0_9 = arith.constant 0 : index
    %c0_10 = arith.constant 0 : index
    %11 = vector.load %arg6[%c0_8, %c0_9, %c0_10] : memref<1x1x512xf32, #tpu.memory_space<vmem>>, vector<1x1x512xf32>
    %12 = vector.shape_cast %11 : vector<1x1x512xf32> to vector<1x512xf32>
    %13 = vector.broadcast %12 : vector<1x512xf32> to vector<8x512xf32>
    %14 = arith.mulf %10, %13 : vector<8x512xf32>
    %c0_11 = arith.constant 0 : index
    %c0_12 = arith.constant 0 : index
    %15 = vector.load %arg8[%c0_11, %c0_12] : memref<8x512xf32, #tpu.memory_space<vmem>>, vector<8x512xf32>
    tpu.vector_store %arg8[%c0_11, %c0_12], %14 {strides = array<i32>} : memref<8x512xf32, #tpu.memory_space<vmem>>, vector<8x512xf32>,
    %cst_13 = arith.constant 0.000000e+00 : f32
    %16 = vector.broadcast %cst_13 : f32 to vector<8x128xf32>
    %17 = vector.extract_strided_slice %4 {offsets = [0, 0], sizes = [8, 1], strides = [1, 1]} : vector<8x5xf32> to vector<8x1xf32>
    %c0_14 = arith.constant 0 : index
    %c0_15 = arith.constant 0 : index
    %18 = vector.load %arg8[%c0_14, %c0_15] : memref<8x512xf32, #tpu.memory_space<vmem>>, vector<8x128xf32>
    %19 = vector.broadcast %17 : vector<8x1xf32> to vector<8x128xf32>
    %20 = arith.mulf %19, %18 : vector<8x128xf32>
    %21 = arith.addf %16, %20 : vector<8x128xf32>
    %22 = vector.extract_strided_slice %4 {offsets = [0, 1], sizes = [8, 1], strides = [1, 1]} : vector<8x5xf32> to vector<8x1xf32>
    %c0_16 = arith.constant 0 : index
    %c256 = arith.constant 256 : index
    %23 = vector.load %arg8[%c0_16, %c256] : memref<8x512xf32, #tpu.memory_space<vmem>>, vector<8x128xf32>
    %24 = vector.broadcast %22 : vector<8x1xf32> to vector<8x128xf32>
    %25 = arith.mulf %24, %23 : vector<8x128xf32>
    %26 = arith.addf %21, %25 : vector<8x128xf32>
    %27 = vector.extract_strided_slice %4 {offsets = [0, 2], sizes = [8, 1], strides = [1, 1]} : vector<8x5xf32> to vector<8x1xf32>
    %c0_17 = arith.constant 0 : index
    %c1 = arith.constant 1 : index
    %28 = vector.load %arg8[%c0_17, %c1] : memref<8x512xf32, #tpu.memory_space<vmem>>, vector<8x128xf32>
    %29 = vector.broadcast %27 : vector<8x1xf32> to vector<8x128xf32>
    %30 = arith.mulf %29, %28 : vector<8x128xf32>
    %31 = arith.addf %26, %30 : vector<8x128xf32>
    %32 = vector.broadcast %6 : vector<8x1xf32> to vector<8x128xf32>
    %33 = arith.addf %31, %32 : vector<8x128xf32>
    %cst_18 = arith.constant 0.000000e+00 : f32
    %34 = vector.broadcast %cst_18 : f32 to vector<8x128xf32>
    %35 = arith.maximumf %33, %34 : vector<8x128xf32>
    %c0_19 = arith.constant 0 : index
    %c0_20 = arith.constant 0 : index
    %c0_21 = arith.constant 0 : index
    %36 = vector.load %arg7[%c0_19, %c0_20, %c0_21] : memref<1x8x128xf32, #tpu.memory_space<vmem>>, vector<1x8x128xf32>
    %37 = vector.shape_cast %36 : vector<1x8x128xf32> to vector<8x128xf32>
    %38 = vector.shape_cast %35 : vector<8x128xf32> to vector<1x8x128xf32>
    tpu.vector_store %arg7[%c0_19, %c0_20, %c0_21], %38 {strides = array<i32>} : memref<1x8x128xf32, #tpu.memory_space<vmem>>, vector<1x8x128xf32>,
    return
  }
  func.func @transform_0(%arg0: i32, %arg1: i32, %arg2: i32) -> (i32, i32, i32, i32) {
    %c0_i32 = arith.constant 0 : i32
    %c0_i32_0 = arith.constant 0 : i32
    %c0_i32_1 = arith.constant 0 : i32
    return %arg0, %arg1, %c0_i32, %c0_i32_0 : i32, i32, i32, i32
  }
  func.func @transform_1(%arg0: i32, %arg1: i32, %arg2: i32) -> (i32, i32) {
    %c0_i32 = arith.constant 0 : i32
    %c0_i32_0 = arith.constant 0 : i32
    return %arg2, %c0_i32 : i32, i32
  }
  func.func @transform_2(%arg0: i32, %arg1: i32, %arg2: i32) -> (i32, i32) {
    %c0_i32 = arith.constant 0 : i32
    %c0_i32_0 = arith.constant 0 : i32
    return %arg2, %c0_i32 : i32, i32
  }
  func.func @transform_3(%arg0: i32, %arg1: i32, %arg2: i32) -> (i32, i32, i32) {
    %c0_i32 = arith.constant 0 : i32
    %c0_i32_0 = arith.constant 0 : i32
    %c0_i32_1 = arith.constant 0 : i32
    return %arg1, %c0_i32, %c0_i32_0 : i32, i32, i32
  }
  func.func @transform_4(%arg0: i32, %arg1: i32, %arg2: i32) -> (i32, i32, i32) {
    %c0_i32 = arith.constant 0 : i32
    return %arg0, %arg2, %arg1 : i32, i32, i32
  }
}

</mosaic_0001>

<llo_original>
// kernel: tpu_custom_call.1
$region0: #{tpu_custom_call.1}
  #allocation0 [shape = 'u32[]', space=smem, size = 0x4, offset = 0x4, fixed_abs, tag = 'smem constant byte address 0x4 - core index']
  #allocation1 [shape = 'u32[72,128]{1,0:T(1,128)}', space=vmem, size = 0x9000, scoped, tag = 'internal scratch']
  #allocation2 [shape = 'f32[8,512]{1,0:T(8,128)}', space=vmem, size = 0x4000, scoped, tag = 'scratch operand']
  %s0 = inlined_call_operand.hbm [shape: f32[2,1,4,512], index: 0, kind: input, shape index: {}]
  %s1 = inlined_call_operand.vmem [shape: f32[8,4], index: 1, kind: input, shape index: {}]
  %s2 = inlined_call_operand.vmem [shape: f32[8,5], index: 2, kind: input, shape index: {}]
  %s3 = inlined_call_operand.vmem [shape: f32[1,1,512], index: 3, kind: input, shape index: {}]
  %s4 = inlined_call_operand.hbm [shape: f32[2,8,128], index: 4, kind: output, shape index: {}]
  %s5 = sld [smem:[#allocation0]]
  $region53: #{tpu_custom_call.1} parent=0
    _
  %s7 = ssub.s32 1, %s5
  %s8 = scalar_select 0, %s7, %s5
  $region1: #{tpu_custom_call.1} parent=0
    #allocation3 [shape = 'u8[16384]{0}', space=vmem, size = 0x4000, scoped, tag = 'input window, operand 0']
    #allocation4 [shape = 's32[2]{0}', space=sflag, size = 0x8, scoped, tag = 'scoped memory for tpu_custom_call.1']
    #allocation5 [shape = 's32[2]{0}', space=sflag, size = 0x8, scoped, tag = 'scoped memory for tpu_custom_call.1']
    #allocation6 [shape = 'u8[8192]{0}', space=vmem, size = 0x2000, scoped, tag = 'output window, operand 0']
    %9 = vsyncpa [#allocation4], 0
    %s10 = scalar_lea.sflag [#allocation4], 1
    %11 = vsyncpa %s10, 0
    %12 = vsyncpa [#allocation5], 0
    %s13 = scalar_lea.sflag [#allocation5], 1
    %14 = vsyncpa %s13, 0
    loop: start=0, step=1, limit=4
    $region2: #{tpu_custom_call.1} parent=1 // loop_pre_header
      _
    $region3: #{tpu_custom_call.1} parent=1 // loop_header
      %s16 = sphi 0, %s20
      %p17 = scmp.ge.s32.totalorder %s16, 4
      %s23 = sphi 0, %s42
      %s24 = sphi 0, %s38
      %s25 = sphi 0, %s34
      %s26 = sphi 0, %s23
      %s27 = sphi 0, %s24
      %s28 = sphi 0, %s25
      %s29 = sphi 0, %s26
      %s30 = sphi 0, %s27
      %s31 = sphi 0, %s28
      %s47 = sphi 0, %s49
      %s50 = sphi 0, %s47
      %s51 = sphi 0, %s50
      %s67 = sphi 0, %s51
      %s73 = sphi 0, %s75
      %s76 = sphi 0, %s73
      %s77 = sphi 0, %s76
      %s93 = sphi 0, %s77
      %s99 = sphi 0, %s101
      %s102 = sphi 0, %s99
      %s103 = sphi 0, %s102
      %s119 = sphi 0, %s103
      %s125 = sphi 0, %s127
      %s128 = sphi 0, %s125
      %s129 = sphi 0, %s128
      %s145 = sphi 0, %s129
      %s155 = sphi 0, %s157
      %s158 = sphi 0, %s155
      %s159 = sphi 0, %s158
      %s175 = sphi 0, %s159
    $region4: #{tpu_custom_call.1} parent=1 // loop_header_branch
      %19 = sbr.rel (%p17) target = $region8
    $region5: #{tpu_custom_call.1} parent=1 // loop_body
      %s21 = ssub.s32 %s16, 1
      %s22 = ssub.s32 %s16, 2
      %s32 = sadd.s32 1, %s25
      %p33 = scmp.ge.s32.totalorder %s32, 1
      %s34 = scalar_select %p33, 0, %s32
      %s35 = sadd.s32 1, %s24
      %s36 = scalar_select %p33, %s35, %s24
      %p37 = scmp.ge.s32.totalorder %s36, 1
      %s38 = scalar_select %p37, 0, %s36
      %s39 = sadd.s32 1, %s23
      %s40 = scalar_select %p37, %s39, %s23
      %p41 = scmp.ge.s32.totalorder %s40, 2
      %s42 = scalar_select %p41, 0, %s40
      %s43 = ssub.s32 %s23, %s42
      %s44 = ssub.s32 %s24, %s38
      %s45 = sor.u32 %s43, %s44
      %p46 = scmp.eq.s32.totalorder %s45, 0
      %s48 = sadd.s32 %s47, 1
      %s49 = scalar_select %p46, %s47, %s48
      %p52 = pneg %p46
      %p53 = scmp.eq.s32.totalorder %s16, 1
      %p54 = por %p52, %p53
      %p55 = scmp.ne.s32.totalorder %s47, %s50
      %p56 = scmp.eq.s32.totalorder %s16, 0
      %p57 = por %p55, %p56
      %p58 = scmp.ne.s32.totalorder %s47, %s50
      %p59 = scmp.eq.s32.totalorder %s21, 1
      %p60 = por %p58, %p59
      %p61 = scmp.ne.s32.totalorder %s50, %s51
      %p62 = scmp.eq.s32.totalorder %s21, 0
      %p63 = por %p61, %p62
      %p64 = scmp.ne.s32.totalorder %s50, %s51
      %p65 = scmp.eq.s32.totalorder %s22, 1
      %p66 = por %p64, %p65
      %p68 = scmp.ne.s32.totalorder %s51, %s67
      %p69 = scmp.eq.s32.totalorder %s22, 0
      %p70 = por %p68, %p69
      %s71 = ssub.s32 %s25, %s34
      %p72 = scmp.eq.s32.totalorder %s71, 0
      %s74 = sadd.s32 %s73, 1
      %s75 = scalar_select %p72, %s73, %s74
      %p78 = pneg %p72
      %p79 = scmp.eq.s32.totalorder %s16, 1
      %p80 = por %p78, %p79
      %p81 = scmp.ne.s32.totalorder %s73, %s76
      %p82 = scmp.eq.s32.totalorder %s16, 0
      %p83 = por %p81, %p82
      %p84 = scmp.ne.s32.totalorder %s73, %s76
      %p85 = scmp.eq.s32.totalorder %s21, 1
      %p86 = por %p84, %p85
      %p87 = scmp.ne.s32.totalorder %s76, %s77
      %p88 = scmp.eq.s32.totalorder %s21, 0
      %p89 = por %p87, %p88
      %p90 = scmp.ne.s32.totalorder %s76, %s77
      %p91 = scmp.eq.s32.totalorder %s22, 1
      %p92 = por %p90, %p91
      %p94 = scmp.ne.s32.totalorder %s77, %s93
      %p95 = scmp.eq.s32.totalorder %s22, 0
      %p96 = por %p94, %p95
      %s97 = ssub.s32 %s25, %s34
      %p98 = scmp.eq.s32.totalorder %s97, 0
      %s100 = sadd.s32 %s99, 1
      %s101 = scalar_select %p98, %s99, %s100
      %p104 = pneg %p98
      %p105 = scmp.eq.s32.totalorder %s16, 1
      %p106 = por %p104, %p105
      %p107 = scmp.ne.s32.totalorder %s99, %s102
      %p108 = scmp.eq.s32.totalorder %s16, 0
      %p109 = por %p107, %p108
      %p110 = scmp.ne.s32.totalorder %s99, %s102
      %p111 = scmp.eq.s32.totalorder %s21, 1
      %p112 = por %p110, %p111
      %p113 = scmp.ne.s32.totalorder %s102, %s103
      %p114 = scmp.eq.s32.totalorder %s21, 0
      %p115 = por %p113, %p114
      %p116 = scmp.ne.s32.totalorder %s102, %s103
      %p117 = scmp.eq.s32.totalorder %s22, 1
      %p118 = por %p116, %p117
      %p120 = scmp.ne.s32.totalorder %s103, %s119
      %p121 = scmp.eq.s32.totalorder %s22, 0
      %p122 = por %p120, %p121
      %s123 = ssub.s32 %s24, %s38
      %p124 = scmp.eq.s32.totalorder %s123, 0
      %s126 = sadd.s32 %s125, 1
      %s127 = scalar_select %p124, %s125, %s126
      %p130 = pneg %p124
      %p131 = scmp.eq.s32.totalorder %s16, 1
      %p132 = por %p130, %p131
      %p133 = scmp.ne.s32.totalorder %s125, %s128
      %p134 = scmp.eq.s32.totalorder %s16, 0
      %p135 = por %p133, %p134
      %p136 = scmp.ne.s32.totalorder %s125, %s128
      %p137 = scmp.eq.s32.totalorder %s21, 1
      %p138 = por %p136, %p137
      %p139 = scmp.ne.s32.totalorder %s128, %s129
      %p140 = scmp.eq.s32.totalorder %s21, 0
      %p141 = por %p139, %p140
      %p142 = scmp.ne.s32.totalorder %s128, %s129
      %p143 = scmp.eq.s32.totalorder %s22, 1
      %p144 = por %p142, %p143
      %p146 = scmp.ne.s32.totalorder %s129, %s145
      %p147 = scmp.eq.s32.totalorder %s22, 0
      %p148 = por %p146, %p147
      %s149 = ssub.s32 %s23, %s42
      %s150 = ssub.s32 %s25, %s34
      %s151 = sor.u32 %s149, %s150
      %s152 = ssub.s32 %s24, %s38
      %s153 = sor.u32 %s151, %s152
      %p154 = scmp.eq.s32.totalorder %s153, 0
      %s156 = sadd.s32 %s155, 1
      %s157 = scalar_select %p154, %s155, %s156
      %p160 = pneg %p154
      %p161 = scmp.eq.s32.totalorder %s16, 1
      %p162 = por %p160, %p161
      %p163 = scmp.ne.s32.totalorder %s155, %s158
      %p164 = scmp.eq.s32.totalorder %s16, 0
      %p165 = por %p163, %p164
      %p166 = scmp.ne.s32.totalorder %s155, %s158
      %p167 = scmp.eq.s32.totalorder %s21, 1
      %p168 = por %p166, %p167
      %p169 = scmp.ne.s32.totalorder %s158, %s159
      %p170 = scmp.eq.s32.totalorder %s21, 0
      %p171 = por %p169, %p170
      %p172 = scmp.ne.s32.totalorder %s158, %s159
      %p173 = scmp.eq.s32.totalorder %s22, 1
      %p174 = por %p172, %p173
      %p176 = scmp.ne.s32.totalorder %s159, %s175
      %p177 = scmp.eq.s32.totalorder %s22, 0
      %p178 = por %p176, %p177
      %p179 = scmp.le.s32.totalorder 1, %s16
      %p180 = scmp.lt.s32.totalorder %s16, 3
      %p181 = pnand %p179, %p180
      %p182 = pneg %p181
      // Predicated region
      $region9: #{tpu_custom_call.1} parent=5 // pred_check
        _
      $region10: #{tpu_custom_call.1} parent=5 // pred_check_branch
        %184 = sbr.rel (%p181) target = $region12
      $region11: #{tpu_custom_call.1} parent=5 // pred_region
        %s185 = ssub.s32 %s16, 1
        // Predicated region
        $region13: #{tpu_custom_call.1} parent=11 // pred_check
          %p186 = pneg %p89
        $region14: #{tpu_custom_call.1} parent=11 // pred_check_branch
          %188 = sbr.rel (%p186) target = $region16
        $region15: #{tpu_custom_call.1} parent=11 // pred_region
          %p189 = scmp.lt.s32.totalorder %s28, 0
          %s190 = scalar_select %p189, %s28, 0
          %s191 = smul.addr %s190, 8
          %s192 = scalar_lea.vmem %s1, %s191
        $region16: #{tpu_custom_call.1} parent=11 // pred_fallthru
          _
        // Predicated region
        $region17: #{tpu_custom_call.1} parent=11 // pred_check
          %p193 = pneg %p115
        $region18: #{tpu_custom_call.1} parent=11 // pred_check_branch
          %195 = sbr.rel (%p193) target = $region20
        $region19: #{tpu_custom_call.1} parent=11 // pred_region
          %p196 = scmp.lt.s32.totalorder %s28, 0
          %s197 = scalar_select %p196, %s28, 0
          %s198 = smul.addr %s197, 8
          %s199 = scalar_lea.vmem %s2, %s198
        $region20: #{tpu_custom_call.1} parent=11 // pred_fallthru
          _
        // Predicated region
        $region21: #{tpu_custom_call.1} parent=11 // pred_check
          %p200 = pneg %p141
        $region22: #{tpu_custom_call.1} parent=11 // pred_check_branch
          %202 = sbr.rel (%p200) target = $region24
        $region23: #{tpu_custom_call.1} parent=11 // pred_region
          %p203 = scmp.lt.s32.totalorder %s27, 0
          %s204 = scalar_select %p203, %s27, 0
          %s205 = smul.addr %s204, 4
          %s206 = scalar_lea.vmem %s3, %s205
        $region24: #{tpu_custom_call.1} parent=11 // pred_fallthru
          _
      $region12: #{tpu_custom_call.1} parent=5 // pred_fallthru
        _
      %p207 = scmp.lt.s32.totalorder %s16, 2
      // Predicated region
      $region25: #{tpu_custom_call.1} parent=5 // pred_check
        %p208 = pneg %p207
      $region26: #{tpu_custom_call.1} parent=5 // pred_check_branch
        %210 = sbr.rel (%p208) target = $region28
      $region27: #{tpu_custom_call.1} parent=5 // pred_region
        // Predicated region
        $region29: #{tpu_custom_call.1} parent=27 // pred_check
          %p211 = pneg %p57
        $region30: #{tpu_custom_call.1} parent=27 // pred_check_branch
          %213 = sbr.rel (%p211) target = $region32
        $region31: #{tpu_custom_call.1} parent=27 // pred_region
          %s214 = sand.u32 %s47, 1
          %s215 = scalar_lea.sflag [#allocation4], %s214
          %s216 = sand.u32 %s47, 1
          %s217 = smul.addr %s216, 16
          %s218 = scalar_lea.vmem [#allocation3], %s217
          %220 = vsyncadd %s215, 0
          %s221 = smul.addr %s24, 4
          %s222 = smul.addr %s23, 4
          %s223 = sadd.s32 %s221, %s222
          %s224 = smul.addr %s223, 4
          %s225 = scalar_lea.hbm %s0, %s224
          %s227 = sshll.u32 %s225, 4
          %s228 = int_to_ptr.hbm [resolvable:$true] %s227
          %s229 = sshll.u32 %s218, 4
          %s230 = int_to_ptr.vmem [resolvable:$true] %s229
          %232 = dma.hbm_to_vmem [thread:$0]  %s228, 256, %s230, %s215
        $region32: #{tpu_custom_call.1} parent=27 // pred_fallthru
          _
      $region28: #{tpu_custom_call.1} parent=5 // pred_fallthru
        _
      %p233 = scmp.le.s32.totalorder 1, %s16
      %p234 = scmp.lt.s32.totalorder %s16, 3
      %p235 = pnand %p233, %p234
      %p236 = pneg %p235
      // Predicated region
      $region33: #{tpu_custom_call.1} parent=5 // pred_check
        _
      $region34: #{tpu_custom_call.1} parent=5 // pred_check_branch
        %238 = sbr.rel (%p235) target = $region36
      $region35: #{tpu_custom_call.1} parent=5 // pred_region
        %s239 = ssub.s32 %s16, 1
        %s240 = sand.u32 %s50, 1
        %s241 = scalar_lea.sflag [#allocation4], %s240
        %s242 = sand.u32 %s50, 1
        %s243 = smul.addr %s242, 16
        %s244 = scalar_lea.vmem [#allocation3], %s243
        // Predicated region
        $region37: #{tpu_custom_call.1} parent=35 // pred_check
          %p245 = pneg %p63
        $region38: #{tpu_custom_call.1} parent=35 // pred_check_branch
          %247 = sbr.rel (%p245) target = $region40
        $region39: #{tpu_custom_call.1} parent=35 // pred_region
          %249 = dma.done %s241, 256
        $region40: #{tpu_custom_call.1} parent=35 // pred_fallthru
          _
        %s250 = sand.u32 %s50, 1
        %s251 = scalar_lea.sflag [#allocation4], %s250
        %s252 = sand.u32 %s50, 1
        %s253 = smul.addr %s252, 16
        %s254 = scalar_lea.vmem [#allocation3], %s253
        %p255 = pneg %p63
        %p256 = pneg %p60
        %p257 = scmp.lt.s32.totalorder %s28, 0
        %s258 = scalar_select %p257, %s28, 0
        %s259 = smul.addr %s258, 8
        %s260 = scalar_lea.vmem %s1, %s259
        %p261 = pneg %p89
        %p262 = pneg %p86
        %p263 = scmp.lt.s32.totalorder %s28, 0
        %s264 = scalar_select %p263, %s28, 0
        %s265 = smul.addr %s264, 8
        %s266 = scalar_lea.vmem %s2, %s265
        %p267 = pneg %p115
        %p268 = pneg %p112
        %p269 = scmp.lt.s32.totalorder %s27, 0
        %s270 = scalar_select %p269, %s27, 0
        %s271 = smul.addr %s270, 4
        %s272 = scalar_lea.vmem %s3, %s271
        %p273 = pneg %p141
        %p274 = pneg %p138
        %p275 = pneg %p171
        %p276 = pneg %p168
        %s277 = sand.u32 %s158, 1
        %s278 = scalar_lea.sflag [#allocation5], %s277
        %s279 = sand.u32 %s158, 1
        %s280 = smul.addr %s279, 8
        %s281 = scalar_lea.vmem [#allocation6], %s280
        %p282 = scmp.lt.s32.totalorder %s28, 0
        %s283 = scalar_select %p282, %s28, 0
        %s284 = smul.addr %s283, 8
        %s285 = scalar_lea.vmem %s1, %s284
        %p286 = scmp.lt.s32.totalorder %s28, 0
        %s287 = scalar_select %p286, %s28, 0
        %s288 = smul.addr %s287, 8
        %s289 = scalar_lea.vmem %s2, %s288
        %p290 = scmp.lt.s32.totalorder %s27, 0
        %s291 = scalar_select %p290, %s27, 0
        %s292 = smul.addr %s291, 4
        %s293 = scalar_lea.vmem %s3, %s292
        %v294 = vld [vmem:[%s244] sm:$0xff]
        %v295 = vld [vmem:[%s244 + $0x8] sm:$0xff]
        %v296 = vld [vmem:[%s285] sm:$0xff]
        %v297 = vld [vmem:[%s289] sm:$0xff]
        %299 = vset.pattern.permute.xlu0 3
        %300 = vperm.xlu0 %299, %v297
        %v301 = vpop.permute.xlu0 %300
        %305 = vst [vmem:[#allocation1] ss:$2 sm:$0xff] %v294
        %s306 = scalar_lea.vmem [#allocation1], 16
        %307 = vst [vmem:[%s306] ss:$2 sm:$0xff] %v295
        %v308 = vld.sshfl [vmem:[#allocation1] sm:$0xff pattern:$0x75316420]
        %v309 = vld.sshfl [vmem:[#allocation1 + $0x8] sm:$0xff pattern:$0x75316420]
        %v310 = vld.sshfl [vmem:[#allocation1 + $0x10] sm:$0xff pattern:$0x75316420]
        %v311 = vld.sshfl [vmem:[#allocation1 + $0x18] sm:$0xff pattern:$0x75316420]
        %vm312 = vcmask 31744
        %v314 = vsel %vm312, %v296, 0
        %vm316 = vcmask 1043456
        %v317 = vsel %vm316, %v308, 0
        %v319 = vsel %vm316, %v309, 0
        %v321 = vsel %vm316, %v310, 0
        %v323 = vsel %vm316, %v311, 0
        %325 = vmatpush.msra.mxu0 0.0
        %326 = vmatpush.msra.mxu0 0.0
        %327 = vmatpush.msra.mxu0 0.0
        %328 = vmatpush.msra.mxu0 0.0
        %329 = vmatpush.msra.mxu0 0.0
        %330 = vmatpush.msra.mxu0 0.0
        %331 = vmatpush.msra.mxu0 0.0
        %332 = vmatpush.msra.mxu0 0.0
        %333 = vmatpush.msra.mxu0 0.0
        %334 = vmatpush.msra.mxu0 0.0
        %335 = vmatpush.msra.mxu0 0.0
        %336 = vmatpush.msra.mxu0 0.0
        %337 = vmatpush.msra.mxu0 0.0
        %338 = vmatpush.msra.mxu0 0.0
        %339 = vmatpush.msra.mxu0 0.0
        %340 = vmatpush.msra.mxu0 %v317
        %341 = vmatmul.f32.gmra.mxu0 %v314
        %v342 = vpop.f32.mrf.mxu0
        %v343 = vadd.f32 %v301, %v342
        %344 = vdwg.mxu0
        %345 = vmatpush.msra.mxu0 0.0
        %346 = vmatpush.msra.mxu0 0.0
        %347 = vmatpush.msra.mxu0 0.0
        %348 = vmatpush.msra.mxu0 0.0
        %349 = vmatpush.msra.mxu0 0.0
        %350 = vmatpush.msra.mxu0 0.0
        %351 = vmatpush.msra.mxu0 0.0
        %352 = vmatpush.msra.mxu0 0.0
        %353 = vmatpush.msra.mxu0 0.0
        %354 = vmatpush.msra.mxu0 0.0
        %355 = vmatpush.msra.mxu0 0.0
        %356 = vmatpush.msra.mxu0 0.0
        %357 = vmatpush.msra.mxu0 0.0
        %358 = vmatpush.msra.mxu0 0.0
        %359 = vmatpush.msra.mxu0 0.0
        %360 = vmatpush.msra.mxu0 %v319
        %361 = vmatmul.f32.gmra.mxu0 %v314
        %v362 = vpop.f32.mrf.mxu0
        %v363 = vadd.f32 %v301, %v362
        %364 = vdwg.mxu0
        %365 = vmatpush.msra.mxu0 0.0
        %366 = vmatpush.msra.mxu0 0.0
        %367 = vmatpush.msra.mxu0 0.0
        %368 = vmatpush.msra.mxu0 0.0
        %369 = vmatpush.msra.mxu0 0.0
        %370 = vmatpush.msra.mxu0 0.0
        %371 = vmatpush.msra.mxu0 0.0
        %372 = vmatpush.msra.mxu0 0.0
        %373 = vmatpush.msra.mxu0 0.0
        %374 = vmatpush.msra.mxu0 0.0
        %375 = vmatpush.msra.mxu0 0.0
        %376 = vmatpush.msra.mxu0 0.0
        %377 = vmatpush.msra.mxu0 0.0
        %378 = vmatpush.msra.mxu0 0.0
        %379 = vmatpush.msra.mxu0 0.0
        %380 = vmatpush.msra.mxu0 %v321
        %381 = vmatmul.f32.gmra.mxu0 %v314
        %v382 = vpop.f32.mrf.mxu0
        %v383 = vadd.f32 %v301, %v382
        %384 = vdwg.mxu0
        %385 = vmatpush.msra.mxu0 0.0
        %386 = vmatpush.msra.mxu0 0.0
        %387 = vmatpush.msra.mxu0 0.0
        %388 = vmatpush.msra.mxu0 0.0
        %389 = vmatpush.msra.mxu0 0.0
        %390 = vmatpush.msra.mxu0 0.0
        %391 = vmatpush.msra.mxu0 0.0
        %392 = vmatpush.msra.mxu0 0.0
        %393 = vmatpush.msra.mxu0 0.0
        %394 = vmatpush.msra.mxu0 0.0
        %395 = vmatpush.msra.mxu0 0.0
        %396 = vmatpush.msra.mxu0 0.0
        %397 = vmatpush.msra.mxu0 0.0
        %398 = vmatpush.msra.mxu0 0.0
        %399 = vmatpush.msra.mxu0 0.0
        %400 = vmatpush.msra.mxu0 %v323
        %401 = vmatmul.f32.gmra.mxu0 %v314
        %v402 = vpop.f32.mrf.mxu0
        %v403 = vadd.f32 %v301, %v402
        %404 = vdwg.mxu0
        %v405 = vmax.f32 %v343, 0.0
        %v406 = vmax.f32 %v363, 0.0
        %v407 = vmax.f32 %v383, 0.0
        %v408 = vmax.f32 %v403, 0.0
        %v409 = vld [vmem:[%s293] sm:$0xf]
        %v411 = vperm.slane %v409, 0
        %v412 = vperm.slane %v409, 1
        %v413 = vperm.slane %v409, 2
        %v414 = vperm.slane %v409, 3
        %v419 = vmul.f32 %v405, %v411
        %v420 = vmul.f32 %v406, %v412
        %v421 = vmul.f32 %v407, %v413
        %v422 = vmul.f32 %v408, %v414
        %423 = vst [vmem:[#allocation2] sm:$0xff] %v419
        %424 = vst [vmem:[#allocation2 + $0x8] sm:$0xff] %v420
        %425 = vst [vmem:[#allocation2 + $0x10] sm:$0xff] %v421
        %426 = vst [vmem:[#allocation2 + $0x18] sm:$0xff] %v422
        %v427 = vld [vmem:[#allocation2] sm:$0xff]
        %428 = vset.pattern.permute.xlu0 0
        %429 = vperm.xlu0 %428, %v297
        %v430 = vpop.permute.xlu0 %429
        %v432 = vmul.f32 %v430, %v427
        %v433 = vadd.f32 %v432, 0.0
        %v434 = vld [vmem:[#allocation2 + $0x10] sm:$0xff]
        %435 = vset.pattern.permute.xlu0 1
        %436 = vperm.xlu0 %435, %v297
        %v437 = vpop.permute.xlu0 %436
        %v439 = vmul.f32 %v437, %v434
        %v440 = vadd.f32 %v433, %v439
        %v441 = vld [vmem:[#allocation2] sm:$0xff]
        %v442 = vld [vmem:[#allocation2 + $0x8] sm:$0xff]
        %443 = vset.pattern.permute.xlu0 2
        %444 = vperm.xlu0 %443, %v297
        %v445 = vpop.permute.xlu0 %444
        %v447 = vmul.f32 %v445, %v441
        %v448 = vmul.f32 %v445, %v442
        %451 = vrot.lane.b32.xlu0 %v447, 127
        %v452 = vpop.permute.xlu0 %451
        %453 = vrot.lane.b32.xlu0 %v448, 127
        %v454 = vpop.permute.xlu0 %453
        %vm455 = vcmask 1039360
        %v456 = vsel %vm455, %v452, %v454
        %v458 = vadd.f32 %v440, %v456
        %459 = vset.pattern.permute.xlu0 4
        %460 = vperm.xlu0 %459, %v297
        %v461 = vpop.permute.xlu0 %460
        %v463 = vadd.f32 %v458, %v461
        %v464 = vmax.f32 %v463, 0.0
        %465 = vst [vmem:[%s281] sm:$0xff] %v464
        %s466 = sand.u32 %s158, 1
        %s467 = scalar_lea.sflag [#allocation5], %s466
        %s468 = sand.u32 %s158, 1
        %s469 = smul.addr %s468, 8
        %s470 = scalar_lea.vmem [#allocation6], %s469
        // Predicated region
        $region41: #{tpu_custom_call.1} parent=35 // pred_check
          %p471 = pneg %p168
        $region42: #{tpu_custom_call.1} parent=35 // pred_check_branch
          %473 = sbr.rel (%p471) target = $region44
        $region43: #{tpu_custom_call.1} parent=35 // pred_region
          %475 = vsyncadd %s467, 0
          %s476 = sadd.s32 %s27, %s28
          %s477 = sadd.s32 %s476, %s26
          %s478 = smul.addr %s477, 8
          %s479 = scalar_lea.hbm %s4, %s478
          %s481 = sshll.u32 %s470, 4
          %s482 = int_to_ptr.vmem [resolvable:$true] %s481
          %s483 = sshll.u32 %s479, 4
          %s484 = int_to_ptr.hbm [resolvable:$true] %s483
          %486 = dma.vmem_to_hbm [thread:$0]  %s482, 128, %s484, %s467
        $region44: #{tpu_custom_call.1} parent=35 // pred_fallthru
          _
      $region36: #{tpu_custom_call.1} parent=5 // pred_fallthru
        _
      %p487 = scmp.le.s32.totalorder 2, %s16
      // Predicated region
      $region45: #{tpu_custom_call.1} parent=5 // pred_check
        %p488 = pneg %p487
      $region46: #{tpu_custom_call.1} parent=5 // pred_check_branch
        %490 = sbr.rel (%p488) target = $region48
      $region47: #{tpu_custom_call.1} parent=5 // pred_region
        %s491 = ssub.s32 %s16, 2
        // Predicated region
        $region49: #{tpu_custom_call.1} parent=47 // pred_check
          %p492 = pneg %p174
        $region50: #{tpu_custom_call.1} parent=47 // pred_check_branch
          %494 = sbr.rel (%p492) target = $region52
        $region51: #{tpu_custom_call.1} parent=47 // pred_region
          %s495 = sand.u32 %s159, 1
          %s496 = scalar_lea.sflag [#allocation5], %s495
          %s497 = sand.u32 %s159, 1
          %s498 = smul.addr %s497, 8
          %s499 = scalar_lea.vmem [#allocation6], %s498
          %501 = dma.done %s496, 128
        $region52: #{tpu_custom_call.1} parent=47 // pred_fallthru
          _
      $region48: #{tpu_custom_call.1} parent=5 // pred_fallthru
        _
    $region6: #{tpu_custom_call.1} parent=1 // loop_footer
      %s20 = sadd.s32 1, %s16
    $region7: #{tpu_custom_call.1} parent=1 // loop_footer_branch
      %15 = sbr.rel target = $region3
    $region8: #{tpu_custom_call.1} parent=1 // loop_exit
      _
    %502 = vsyncpa [#allocation4], 1
    %s503 = scalar_lea.sflag [#allocation4], 1
    %504 = vsyncpa %s503, 1
    %505 = vsyncpa [#allocation5], 1
    %s506 = scalar_lea.sflag [#allocation5], 1
    %507 = vsyncpa %s506, 1

</llo_original>
